<compile_context>
chip_gen: v5e
topology: v5e:2x2
jax: 0.10.0
libtpu: 0.0.40
codegen_flags: <defaults>
</compile_context>

<pallas_src>
import functools

import jax
import jax.numpy as jnp
from jax.experimental import pallas as pl
from jax.experimental.pallas import tpu as pltpu


def _round_up(x: int, m: int) -> int:
    return (x + m - 1) // m * m


# ----------------------------------------------------------------------------
# Kernel 1: fused Linear forward  (action = state @ W + b  [+ noise, clamp])
# ----------------------------------------------------------------------------
def _linear_kernel(*refs, add_noise):
    if add_noise:
        x_ref, w_ref, b_ref, noise_ref, o_ref, acc_ref = refs
    else:
        x_ref, w_ref, b_ref, o_ref, acc_ref = refs
        noise_ref = None

    k = pl.program_id(2)

    @pl.when(k == 0)
    def _():
        acc_ref[...] = jnp.zeros_like(acc_ref)

    acc_ref[...] += jnp.dot(x_ref[...], w_ref[...],
                            preferred_element_type=jnp.float32)

    @pl.when(k == pl.num_programs(2) - 1)
    def _():
        act = acc_ref[...] + b_ref[...].astype(jnp.float32)
        if add_noise:
            # ACUpper exploration path: (action + clipped_noise).clamp(0, 1)
            act = jnp.clip(act + noise_ref[...].astype(jnp.float32), 0.0, 1.0)
        o_ref[...] = act.astype(o_ref.dtype)


@functools.partial(jax.jit, static_argnames=("tm", "tn", "tk"))
def _linear_forward_impl(x, w, b, noise, tm, tn, tk):
    M, K = x.shape
    _, N = w.shape

    # Clamp tiles to (8,128)-aligned padded extents; defaults are MXU-shaped
    # 256 tiles (v6e/v7x); tiny shapes collapse to a single aligned block.
    tm = min(tm, _round_up(M, 8))
    tk = min(tk, _round_up(K, 128))
    tn = min(tn, _round_up(N, 128))
    Mp, Kp, Np = _round_up(M, tm), _round_up(K, tk), _round_up(N, tn)

    xp = jnp.pad(x, ((0, Mp - M), (0, Kp - K)))
    wp = jnp.pad(w, ((0, Kp - K), (0, Np - N)))
    bp = jnp.pad(b.reshape(1, N), ((0, 0), (0, Np - N)))

    add_noise = noise is not None
    in_specs = [
        pl.BlockSpec((tm, tk), lambda i, j, k: (i, k)),
        pl.BlockSpec((tk, tn), lambda i, j, k: (k, j)),
        pl.BlockSpec((1, tn), lambda i, j, k: (0, j)),
    ]
    args = [xp, wp, bp]
    if add_noise:
        noisep = jnp.pad(noise, ((0, Mp - M), (0, Np - N)))
        in_specs.append(pl.BlockSpec((tm, tn), lambda i, j, k: (i, j)))
        args.append(noisep)

    out = pl.pallas_call(
        functools.partial(_linear_kernel, add_noise=add_noise),
        out_shape=jax.ShapeDtypeStruct((Mp, Np), x.dtype),
        grid_spec=pltpu.PrefetchScalarGridSpec(
            num_scalar_prefetch=0,
            grid=(Mp // tm, Np // tn, Kp // tk),
            in_specs=in_specs,
            out_specs=pl.BlockSpec((tm, tn), lambda i, j, k: (i, j)),
            scratch_shapes=[pltpu.VMEM((tm, tn), jnp.float32)],
        ),
        compiler_params=pltpu.CompilerParams(
            dimension_semantics=("parallel", "parallel", "arbitrary")),
    )(*args)
    return out[:M, :N]


def linear_forward(x, w, b, noise=None, *, tm=256, tn=256, tk=256):
    """Fused Linear (+ optional clipped-noise + clamp) via one Pallas kernel."""
    return _linear_forward_impl(x, w, b, noise, tm=tm, tn=tn, tk=tk)


# ----------------------------------------------------------------------------
# Kernel 2: fused soft update (BaseAgent.sync_weight) over ALL params at once.
#   target <- target + tau * (eval - target)
# ----------------------------------------------------------------------------
_LANES = 1024  # lane-dense slab width (8 vregs wide)


def _soft_update_kernel(tau_ref, tgt_ref, ev_ref, o_ref):
    tau = tau_ref[0]                       # scalar from SMEM (no recompile per tau)
    t = tgt_ref[...]
    o_ref[...] = (t + tau * (ev_ref[...] - t)).astype(o_ref.dtype)


@jax.jit
def fused_soft_update(target_params, eval_params, tau):
    """Polyak-average an arbitrary pytree of params with a single pallas_call."""
    t_leaves, treedef = jax.tree_util.tree_flatten(target_params)
    e_leaves = jax.tree_util.tree_leaves(eval_params)
    sizes = [int(l.size) for l in t_leaves]
    shapes = [l.shape for l in t_leaves]

    flat_t = jnp.concatenate([l.reshape(-1) for l in t_leaves])
    flat_e = jnp.concatenate([l.reshape(-1) for l in e_leaves])
    n = int(flat_t.shape[0])

    # Lane/sublane-dense 2D layout, tiled so large models stream through VMEM
    # double-buffered.  512x1024 f32 blocks: ~2 MiB/block -> well under the
    # v7x 32 MiB scoped / 64 MiB physical VMEM budget even with 3 buffered refs.
    rows_needed = -(-n // _LANES)
    block_rows = min(512, _round_up(rows_needed, 8))
    rows = _round_up(rows_needed, block_rows)
    pad = rows * _LANES - n

    t2 = jnp.pad(flat_t, (0, pad)).reshape(rows, _LANES)
    e2 = jnp.pad(flat_e, (0, pad)).reshape(rows, _LANES)
    tau_arr = jnp.reshape(tau, (1,)).astype(jnp.float32)

    out2 = pl.pallas_call(
        _soft_update_kernel,
        out_shape=jax.ShapeDtypeStruct(t2.shape, t2.dtype),
        grid_spec=pltpu.PrefetchScalarGridSpec(
            num_scalar_prefetch=0,
            grid=(rows // block_rows,),
            in_specs=[
                pl.BlockSpec(memory_space=pltpu.MemorySpace.SMEM),   # tau
                pl.BlockSpec((block_rows, _LANES), lambda i: (i, 0)),  # target
                pl.BlockSpec((block_rows, _LANES), lambda i: (i, 0)),  # eval
            ],
            out_specs=pl.BlockSpec((block_rows, _LANES), lambda i: (i, 0)),
        ),
        input_output_aliases={1: 0},  # update target in place (no second copy)
        compiler_params=pltpu.CompilerParams(
            dimension_semantics=("parallel",)),
    )(tau_arr, t2, e2)

    out_flat = out2.reshape(-1)[:n]
    new_leaves, off = [], 0
    for size, shape in zip(sizes, shapes):
        new_leaves.append(out_flat[off:off + size].reshape(shape))
        off += size
    return jax.tree_util.tree_unflatten(treedef, new_leaves)


# ----------------------------------------------------------------------------
# ACUpper (DDPG upper agent) with Pallas forward / sync_weight.
# ----------------------------------------------------------------------------
class PallasACUpper:
    def __init__(self, obs_dim, action_dim, *, soft_target_tau=0.05,
                 gamma=0.99, key=None):
        if key is None:
            key = jax.random.PRNGKey(0)
        ka, kc, kta, ktc = jax.random.split(key, 4)
        critic_in = obs_dim + 2  # concat(state, u_action, l_action)

        # ActorNew / CriticNew are external; minimal Linear stand-ins.
        self.actor = {
            "w": jax.random.normal(ka, (obs_dim, action_dim), jnp.float32) * 0.1,
            "b": jnp.linspace(-0.5, 0.5, action_dim, dtype=jnp.float32),
        }
        self.critic = {
            "w": jax.random.normal(kc, (critic_in, 1), jnp.float32) * 0.1,
            "b": jnp.zeros((1,), jnp.float32),
        }
        # DDPG-style target copies; BaseAgent.sync_weight polyak-averages these.
        self.target_actor = {
            "w": jax.random.normal(kta, (obs_dim, action_dim), jnp.float32) * 0.1,
            "b": jnp.zeros((action_dim,), jnp.float32),
        }
        self.target_critic = {
            "w": jax.random.normal(ktc, (critic_in, 1), jnp.float32) * 0.1,
            "b": jnp.zeros((1,), jnp.float32),
        }
        self.eval_net = {"actor": self.actor, "critic": self.critic}
        self.target_net = {"actor": self.target_actor, "critic": self.target_critic}

        self.soft_target_tau = soft_target_tau
        self.gamma = gamma
        self.noise_lim = 0.3
        self.noise_std = 0.1

    def forward(self, state, eval_tag=True, key=None):
        w, b = self.actor["w"], self.actor["b"]
        if eval_tag:
            return linear_forward(state, w, b)
        if key is None:
            key = jax.random.PRNGKey(0)
        noise = jnp.clip(
            self.noise_std * jax.random.normal(
                key, (state.shape[0], w.shape[1]), state.dtype),
            -self.noise_lim, self.noise_lim)
        return linear_forward(state, w, b, noise=noise)

    def critic_q(self, state, u_action, l_action):
        x = jnp.concatenate([state, u_action, l_action], axis=1)
        return linear_forward(x, self.critic["w"], self.critic["b"])

    def update(self, batch):
        # TODO(synk): MSE losses, autograd backward and the two Adam optimizer
        # steps are host-side training logic (grads + optimizer state) with no
        # single Pallas-kernel equivalent; forward building blocks above are
        # what Pallas covers.
        return None

    def sync_weight(self):
        # Single fused Pallas launch over every target parameter.
        self.target_net = fused_soft_update(
            self.target_net, self.eval_net, self.soft_target_tau)
        self.target_actor = self.target_net["actor"]
        self.target_critic = self.target_net["critic"]


if __name__ == "__main__":
    root = jax.random.PRNGKey(0)
    k_param, k_state, k_noise = jax.random.split(root, 3)

    batch, obs_dim, n_actions = 8, 32, 8
    agent = PallasACUpper(obs_dim, n_actions, soft_target_tau=0.05, key=k_param)
    state = jax.random.normal(k_state, (batch, obs_dim), jnp.float32)

    # (1) eval forward: action = actor(state)
    act = jax.block_until_ready(agent.forward(state, eval_tag=True))
    act_ref = state @ agent.actor["w"] + agent.actor["b"]
    assert jnp.allclose(act, act_ref, atol=1e-5), "eval forward mismatch"

    # (2) exploration forward: (action + clipped noise).clamp(0, 1)
    act_n = jax.block_until_ready(agent.forward(state, eval_tag=False, key=k_noise))
    noise = jnp.clip(
        agent.noise_std * jax.random.normal(k_noise, act_ref.shape, act_ref.dtype),
        -agent.noise_lim, agent.noise_lim)
    act_n_ref = jnp.clip(act_ref + noise, 0.0, 1.0)
    assert jnp.allclose(act_n, act_n_ref, atol=1e-5), "noisy forward mismatch"

    # (3) sync_weight: one fused Pallas polyak update across all target params
    old_tw = agent.target_net["actor"]["w"]
    old_cw = agent.target_net["critic"]["w"]
    agent.sync_weight()
    new_tw = jax.block_until_ready(agent.target_net["actor"]["w"])
    tau = agent.soft_target_tau
    ref_tw = tau * agent.eval_net["actor"]["w"] + (1.0 - tau) * old_tw
    ref_cw = tau * agent.eval_net["critic"]["w"] + (1.0 - tau) * old_cw
    assert jnp.allclose(new_tw, ref_tw, atol=1e-5), "soft_update (actor) mismatch"
    assert jnp.allclose(agent.target_net["critic"]["w"], ref_cw, atol=1e-5), \
        "soft_update (critic) mismatch"

    print("KERNEL_OK")
</pallas_src>

<mosaic_0001>
module attributes {stable_mosaic.version = 11 : i64} {
  func.func @_linear_kernel(%arg0: i32, %arg1: i32, %arg2: i32, %arg3: memref<8x128xf32, #tpu.memory_space<vmem>>, %arg4: memref<128x128xf32, #tpu.memory_space<vmem>>, %arg5: memref<1x128xf32, #tpu.memory_space<vmem>>, %arg6: memref<8x128xf32, #tpu.memory_space<vmem>>, %arg7: memref<8x128xf32, #tpu.memory_space<vmem>>) attributes {dimension_semantics = [#tpu.dimension_semantics<parallel>, #tpu.dimension_semantics<parallel>, #tpu.dimension_semantics<arbitrary>], iteration_bounds = array<i64: 1, 1, 1>, scalar_prefetch = 0 : i64, scratch_operands = 1 : i64, tpu.core_type = #tpu.core_type<tc>, window_params = [{transform_indices = @transform_0, window_bounds = array<i64: 8, 128>}, {transform_indices = @transform_1, window_bounds = array<i64: 128, 128>}, {transform_indices = @transform_2, window_bounds = array<i64: 1, 128>}, {transform_indices = @transform_3, window_bounds = array<i64: 8, 128>}]} {
    %c0_i32 = arith.constant 0 : i32
    %0 = arith.cmpi eq, %arg2, %c0_i32 : i32
    %1 = arith.extui %0 : i1 to i32
    %c0_i32_0 = arith.constant 0 : i32
    %2 = arith.cmpi ne, %1, %c0_i32_0 : i32
    scf.if %2 {
      %cst_10 = arith.constant 0.000000e+00 : f32
      %12 = vector.broadcast %cst_10 : f32 to vector<8x128xf32>
      %c0_11 = arith.constant 0 : index
      %c0_12 = arith.constant 0 : index
      %13 = vector.load %arg7[%c0_11, %c0_12] : memref<8x128xf32, #tpu.memory_space<vmem>>, vector<8x128xf32>
      tpu.vector_store %arg7[%c0_11, %c0_12], %12 {strides = array<i32>} : memref<8x128xf32, #tpu.memory_space<vmem>>, vector<8x128xf32>,
    } else {
    }
    %c0 = arith.constant 0 : index
    %c0_1 = arith.constant 0 : index
    %3 = vector.load %arg7[%c0, %c0_1] : memref<8x128xf32, #tpu.memory_space<vmem>>, vector<8x128xf32>
    %c0_2 = arith.constant 0 : index
    %c0_3 = arith.constant 0 : index
    %4 = vector.load %arg3[%c0_2, %c0_3] : memref<8x128xf32, #tpu.memory_space<vmem>>, vector<8x128xf32>
    %c0_4 = arith.constant 0 : index
    %c0_5 = arith.constant 0 : index
    %5 = vector.load %arg4[%c0_4, %c0_5] : memref<128x128xf32, #tpu.memory_space<vmem>>, vector<128x128xf32>
    %cst = arith.constant dense<0.000000e+00> : vector<8x128xf32>
    %6 = tpu.matmul %4, %5, %cst {dimension_numbers = #tpu.dot_dimension_numbers<[1], [0], [0], [1], [0, 0, 1, 1], [], []>} : vector<8x128xf32>, vector<128x128xf32>, vector<8x128xf32> -> vector<8x128xf32>
    %7 = arith.addf %3, %6 : vector<8x128xf32>
    %c0_6 = arith.constant 0 : index
    %c0_7 = arith.constant 0 : index
    %8 = vector.load %arg7[%c0_6, %c0_7] : memref<8x128xf32, #tpu.memory_space<vmem>>, vector<8x128xf32>
    tpu.vector_store %arg7[%c0_6, %c0_7], %7 {strides = array<i32>} : memref<8x128xf32, #tpu.memory_space<vmem>>, vector<8x128xf32>,
    %c0_i32_8 = arith.constant 0 : i32
    %9 = arith.cmpi eq, %arg2, %c0_i32_8 : i32
    %10 = arith.extui %9 : i1 to i32
    %c0_i32_9 = arith.constant 0 : i32
    %11 = arith.cmpi ne, %10, %c0_i32_9 : i32
    scf.if %11 {
      %c0_10 = arith.constant 0 : index
      %c0_11 = arith.constant 0 : index
      %12 = vector.load %arg7[%c0_10, %c0_11] : memref<8x128xf32, #tpu.memory_space<vmem>>, vector<8x128xf32>
      %c0_12 = arith.constant 0 : index
      %c0_13 = arith.constant 0 : index
      %13 = vector.load %arg5[%c0_12, %c0_13] : memref<1x128xf32, #tpu.memory_space<vmem>>, vector<1x128xf32>
      %14 = vector.broadcast %13 : vector<1x128xf32> to vector<8x128xf32>
      %15 = arith.addf %12, %14 : vector<8x128xf32>
      %c0_14 = arith.constant 0 : index
      %c0_15 = arith.constant 0 : index
      %16 = vector.load %arg6[%c0_14, %c0_15] : memref<8x128xf32, #tpu.memory_space<vmem>>, vector<8x128xf32>
      tpu.vector_store %arg6[%c0_14, %c0_15], %15 {strides = array<i32>} : memref<8x128xf32, #tpu.memory_space<vmem>>, vector<8x128xf32>,
    } else {
    }
    return
  }
  func.func @transform_0(%arg0: i32, %arg1: i32, %arg2: i32) -> (i32, i32) {
    %c0_i32 = arith.constant 0 : i32
    return %arg0, %arg2 : i32, i32
  }
  func.func @transform_1(%arg0: i32, %arg1: i32, %arg2: i32) -> (i32, i32) {
    %c0_i32 = arith.constant 0 : i32
    return %arg2, %arg1 : i32, i32
  }
  func.func @transform_2(%arg0: i32, %arg1: i32, %arg2: i32) -> (i32, i32) {
    %c0_i32 = arith.constant 0 : i32
    %c0_i32_0 = arith.constant 0 : i32
    return %c0_i32, %arg1 : i32, i32
  }
  func.func @transform_3(%arg0: i32, %arg1: i32, %arg2: i32) -> (i32, i32) {
    %c0_i32 = arith.constant 0 : i32
    return %arg0, %arg1 : i32, i32
  }
}

</mosaic_0001>

<llo_original>
// kernel: _linear_forward_impl.1
$region0: #{_linear_forward_impl.1}
  #allocation0 [shape = 'u32[]', space=smem, size = 0x4, offset = 0x4, fixed_abs, tag = 'smem constant byte address 0x4 - core index']
  #allocation1 [shape = 'u32[72,128]{1,0:T(1,128)}', space=vmem, size = 0x9000, scoped, tag = 'internal scratch']
  #allocation2 [shape = 'f32[8,128]{1,0:T(8,128)}', space=vmem, size = 0x1000, scoped, tag = 'scratch operand']
  %s0 = inlined_call_operand.vmem [shape: f32[8,128], index: 0, kind: input, shape index: {}]
  %s1 = inlined_call_operand.vmem [shape: f32[128,128], index: 1, kind: input, shape index: {}]
  %s2 = inlined_call_operand.vmem [shape: f32[1,128], index: 2, kind: input, shape index: {}]
  %s3 = inlined_call_operand.hbm [shape: f32[8,128], index: 3, kind: output, shape index: {}]
  %s4 = sld [smem:[#allocation0]]
  $region30: #{_linear_forward_impl.1} parent=0
    _
  %s6 = ssub.s32 1, %s4
  %s7 = scalar_select 0, %s6, %s4
  $region1: #{_linear_forward_impl.1} parent=0
    #allocation3 [shape = 'u8[4096]{0}', space=vmem, size = 0x1000, scoped, tag = 'output window, operand 0, single buffered']
    #allocation4 [shape = 's32[1]{0}', space=sflag, size = 0x4, scoped, tag = 'scoped memory for _linear_forward_impl.1']
    %8 = vsyncpa [#allocation4], 0
    // Predicated region
    $region2: #{_linear_forward_impl.1} parent=1 // pred_check
      _
    $region3: #{_linear_forward_impl.1} parent=1 // pred_check_branch
      %10 = sbr.rel (0) target = $region5
    $region4: #{_linear_forward_impl.1} parent=1 // pred_region
      _
    $region5: #{_linear_forward_impl.1} parent=1 // pred_fallthru
      _
    // Predicated region
    $region6: #{_linear_forward_impl.1} parent=1 // pred_check
      _
    $region7: #{_linear_forward_impl.1} parent=1 // pred_check_branch
      %12 = sbr.rel (0) target = $region9
    $region8: #{_linear_forward_impl.1} parent=1 // pred_region
      _
    $region9: #{_linear_forward_impl.1} parent=1 // pred_fallthru
      _
    // Predicated region
    $region10: #{_linear_forward_impl.1} parent=1 // pred_check
      _
    $region11: #{_linear_forward_impl.1} parent=1 // pred_check_branch
      %14 = sbr.rel (0) target = $region13
    $region12: #{_linear_forward_impl.1} parent=1 // pred_region
      _
    $region13: #{_linear_forward_impl.1} parent=1 // pred_fallthru
      _
    %p15 = scmp.eq.s32.totalorder 0, 0
    // Predicated region
    $region14: #{_linear_forward_impl.1} parent=1 // pred_check
      %p16 = pneg %p15
    $region15: #{_linear_forward_impl.1} parent=1 // pred_check_branch
      %18 = sbr.rel (%p16) target = $region17
    $region16: #{_linear_forward_impl.1} parent=1 // pred_region
      %19 = vst [vmem:[#allocation2] sm:$0xff] 0.0
    $region17: #{_linear_forward_impl.1} parent=1 // pred_fallthru
      _
    %v20 = vld [vmem:[#allocation2] sm:$0xff]
    %v21 = vld [vmem:[%s0] sm:$0xff]
    %v22 = vld [vmem:[%s1] sm:$0xff]
    %v23 = vld [vmem:[%s1 + $0x8] sm:$0xff]
    %v24 = vld [vmem:[%s1 + $0x10] sm:$0xff]
    %v25 = vld [vmem:[%s1 + $0x18] sm:$0xff]
    %v26 = vld [vmem:[%s1 + $0x20] sm:$0xff]
    %v27 = vld [vmem:[%s1 + $0x28] sm:$0xff]
    %v28 = vld [vmem:[%s1 + $0x30] sm:$0xff]
    %v29 = vld [vmem:[%s1 + $0x38] sm:$0xff]
    %v30 = vld [vmem:[%s1 + $0x40] sm:$0xff]
    %v31 = vld [vmem:[%s1 + $0x48] sm:$0xff]
    %v32 = vld [vmem:[%s1 + $0x50] sm:$0xff]
    %v33 = vld [vmem:[%s1 + $0x58] sm:$0xff]
    %v34 = vld [vmem:[%s1 + $0x60] sm:$0xff]
    %v35 = vld [vmem:[%s1 + $0x68] sm:$0xff]
    %v36 = vld [vmem:[%s1 + $0x70] sm:$0xff]
    %v37 = vld [vmem:[%s1 + $0x78] sm:$0xff]
    %38 = vmatpush.msra.mxu0 %v37
    %39 = vmatpush.msra.mxu0 %v36
    %40 = vmatpush.msra.mxu0 %v35
    %41 = vmatpush.msra.mxu0 %v34
    %42 = vmatpush.msra.mxu0 %v33
    %43 = vmatpush.msra.mxu0 %v32
    %44 = vmatpush.msra.mxu0 %v31
    %45 = vmatpush.msra.mxu0 %v30
    %46 = vmatpush.msra.mxu0 %v29
    %47 = vmatpush.msra.mxu0 %v28
    %48 = vmatpush.msra.mxu0 %v27
    %49 = vmatpush.msra.mxu0 %v26
    %50 = vmatpush.msra.mxu0 %v25
    %51 = vmatpush.msra.mxu0 %v24
    %52 = vmatpush.msra.mxu0 %v23
    %53 = vmatpush.msra.mxu0 %v22
    %54 = vmatmul.f32.gmra.mxu0 %v21
    %v55 = vpop.f32.mrf.mxu0
    %v56 = vadd.f32 0.0, %v55
    %57 = vdwg.mxu0
    %v58 = vadd.f32 %v20, %v56
    %59 = vst [vmem:[#allocation2] sm:$0xff] %v58
    // Predicated region
    $region18: #{_linear_forward_impl.1} parent=1 // pred_check
      %p60 = pneg %p15
    $region19: #{_linear_forward_impl.1} parent=1 // pred_check_branch
      %62 = sbr.rel (%p60) target = $region21
    $region20: #{_linear_forward_impl.1} parent=1 // pred_region
      %v63 = vld [vmem:[#allocation2] sm:$0xff]
      %v64 = vld [vmem:[%s2] sm:$0x1]
      %v66 = vperm.slane %v64, 0
      %v68 = vadd.f32 %v63, %v66
      %69 = vst [vmem:[#allocation3] sm:$0xff] %v68
    $region21: #{_linear_forward_impl.1} parent=1 // pred_fallthru
      _
    // Predicated region
    $region22: #{_linear_forward_impl.1} parent=1 // pred_check
      _
    $region23: #{_linear_forward_impl.1} parent=1 // pred_check_branch
      %71 = sbr.rel (0) target = $region25
    $region24: #{_linear_forward_impl.1} parent=1 // pred_region
      %73 = vsyncadd [#allocation4], 0
      %s75 = sshll.u32 [#allocation3], 4
      %s76 = int_to_ptr.vmem [resolvable:$true] %s75
      %s77 = sshll.u32 %s3, 4
      %s78 = int_to_ptr.hbm [resolvable:$true] %s77
      %80 = dma.vmem_to_hbm [thread:$0]  %s76, 128, %s78, [#allocation4]
    $region25: #{_linear_forward_impl.1} parent=1 // pred_fallthru
      _
    // Predicated region
    $region26: #{_linear_forward_impl.1} parent=1 // pred_check
      _
    $region27: #{_linear_forward_impl.1} parent=1 // pred_check_branch
      %82 = sbr.rel (0) target = $region29
    $region28: #{_linear_forward_impl.1} parent=1 // pred_region
      %84 = dma.done [#allocation4], 128
    $region29: #{_linear_forward_impl.1} parent=1 // pred_fallthru
      _
    %85 = vsyncpa [#allocation4], 1

</llo_original>
